<compile_context>
chip_gen: v5e
topology: v5e:2x2
jax: 0.10.0
libtpu: 0.0.40
codegen_flags: <defaults>
</compile_context>

<pallas_src>
import jax
import jax.numpy as jnp
from jax.experimental import pallas as pl
from jax.experimental.pallas import tpu as pltpu

EPS = 1e-5
LANE = 128
VMEM_LIMIT = 48 * 1024 * 1024   # <= v7x 64 MiB physical, leaves headroom


def _round_up(x, m):
    return (x + m - 1) // m * m


# -----------------------------------------------------------------------------
# Pass 1: conv matmul (K-tiled, accumulated in VMEM scratch) -> per-M-tile
#         partial BN stats (sum, sum of squares).  No y written to HBM.
# -----------------------------------------------------------------------------
def conv_stats_kernel(p_ref, w_ref, stats_ref, acc_ref):
    # p: (TILE_M, TILE_K) bf16   w: (TILE_K, C_pad) bf16
    # stats: (8, C_pad) f32 per-M-tile output   acc: (TILE_M, C_pad) f32 scratch
    k = pl.program_id(1)

    @pl.when(k == 0)
    def _init():
        acc_ref[...] = jnp.zeros_like(acc_ref)

    acc_ref[...] += jnp.dot(p_ref[...], w_ref[...],
                            preferred_element_type=jnp.float32)

    @pl.when(k == pl.num_programs(1) - 1)
    def _finalize():
        y = acc_ref[...]
        # Stats epilogue runs once per M-tile (not per grid step).  Row 0: sum(y),
        # row 1: sum(y*y); zero-padded rows/channels contribute zeros, so dividing
        # by the true M later gives exact batch statistics.
        stats_ref[...] = jnp.zeros_like(stats_ref)
        stats_ref[0:1, :] = jnp.sum(y, axis=0, keepdims=True)
        stats_ref[1:2, :] = jnp.sum(y * y, axis=0, keepdims=True)


# -----------------------------------------------------------------------------
# Pass 2: recompute the conv matmul (accumulated directly in the resident f32
#         output block), then apply the folded BN affine (y*scale + shift) + ReLU.
# -----------------------------------------------------------------------------
def conv_bn_relu_kernel(p_ref, w_ref, scale_ref, shift_ref, o_ref):
    k = pl.program_id(1)

    @pl.when(k == 0)
    def _init():
        o_ref[...] = jnp.zeros_like(o_ref)

    o_ref[...] += jnp.dot(p_ref[...], w_ref[...],
                          preferred_element_type=jnp.float32)

    @pl.when(k == pl.num_programs(1) - 1)
    def _finalize():
        o_ref[...] = jnp.maximum(o_ref[...] * scale_ref[...] + shift_ref[...], 0.0)


def im2col_nchw(x, kh, kw, stride, padding):
    """Patch extraction glue (plain JAX). x: (N, C, H, W) -> (N*Ho*Wo, C*kh*kw)."""
    N, C, H, W = x.shape
    x_pad = jnp.pad(x, ((0, 0), (0, 0), (padding, padding), (padding, padding)))
    Ho = (H + 2 * padding - kh) // stride + 1
    Wo = (W + 2 * padding - kw) // stride + 1
    cols = []
    for i in range(kh):
        for j in range(kw):
            cols.append(x_pad[:, :, i:i + stride * Ho:stride, j:j + stride * Wo:stride])
    # (N, C, kh*kw, Ho, Wo); inner index i*kw + j matches PyTorch weight flattening.
    patches = jnp.stack(cols, axis=2)
    patches = patches.transpose(0, 3, 4, 1, 2).reshape(N * Ho * Wo, C * kh * kw)
    return patches, Ho, Wo


def conv_block_forward(x, w, b, gamma, beta, *, stride=1, padding=1,
                       tile_m=2048, tile_k=1024):
    """x: (N, C_in, H, W) NCHW. w: (C_out, C_in, kh, kw) PyTorch layout."""
    del b  # per-channel conv bias is exactly cancelled by train-mode BN mean subtraction
    C_out, C_in, kh, kw = w.shape
    N = x.shape[0]

    # Explicit im2col in bf16 (single cast; no f32 patch materialization).
    patches, Ho, Wo = im2col_nchw(x.astype(jnp.bfloat16), kh, kw, stride, padding)
    M, K = patches.shape

    # Tiling: lane dim (out channels) and K padded to 128; K gets its own
    # reduction grid axis so large layers never hold all of K in VMEM.
    C_pad = _round_up(C_out, LANE)
    tile_k = _round_up(min(tile_k, _round_up(K, LANE)), LANE)
    K_pad = _round_up(K, tile_k)
    grid_k = K_pad // tile_k
    tile_m = _round_up(max(8, min(tile_m, M)), 8)
    M_pad = _round_up(M, tile_m)
    grid_m = M_pad // tile_m

    # One-shot pad (bf16); zero padding keeps matmul and stats exact.
    patches_p = jnp.pad(patches, ((0, M_pad - M), (0, K_pad - K)))
    w_p = jnp.pad(w.reshape(C_out, C_in * kh * kw).T.astype(jnp.bfloat16),
                  ((0, K_pad - K), (0, C_pad - C_out)))

    flops = 2 * M_pad * K_pad * C_pad
    p_bytes = M_pad * K_pad * 2
    w_bytes = K_pad * C_pad * 2

    # ---- Pass 1: per-M-tile partial BN stats (both grid axes pipelined; M parallel).
    stats_tiles = pl.pallas_call(
        conv_stats_kernel,
        out_shape=jax.ShapeDtypeStruct((grid_m * 8, C_pad), jnp.float32),
        grid_spec=pltpu.PrefetchScalarGridSpec(
            num_scalar_prefetch=0,
            grid=(grid_m, grid_k),
            in_specs=[pl.BlockSpec((tile_m, tile_k), lambda i, k: (i, k)),
                      pl.BlockSpec((tile_k, C_pad), lambda i, k: (k, 0))],
            out_specs=pl.BlockSpec((8, C_pad), lambda i, k: (i, 0)),
            scratch_shapes=[pltpu.VMEM((tile_m, C_pad), jnp.float32)]),
        compiler_params=pltpu.CompilerParams(
            dimension_semantics=("parallel", "arbitrary"),
            vmem_limit_bytes=VMEM_LIMIT),
        cost_estimate=pl.CostEstimate(
            flops=flops, transcendentals=0,
            bytes_accessed=p_bytes + w_bytes + grid_m * 8 * C_pad * 4),
    )(patches_p, w_p)

    # ---- Finalize BN statistics (tiny per-channel math) and fold gamma/beta:
    #   out = (y - mean) * rsqrt(var + eps) * gamma + beta  =  y * scale + shift
    stats = stats_tiles.reshape(grid_m, 8, C_pad).sum(axis=0)
    m_true = jnp.float32(M)
    mean = stats[0:1, :] / m_true
    var = jnp.maximum(stats[1:2, :] / m_true - mean * mean, 0.0)  # biased var (train mode)
    gamma_p = jnp.pad(gamma.astype(jnp.float32), (0, C_pad - C_out)).reshape(1, C_pad)
    beta_p = jnp.pad(beta.astype(jnp.float32), (0, C_pad - C_out)).reshape(1, C_pad)
    scale = gamma_p * jax.lax.rsqrt(var + EPS)
    shift = beta_p - mean * scale

    # ---- Pass 2: recompute matmul + folded BN + ReLU, fully fused, M parallel.
    out2d = pl.pallas_call(
        conv_bn_relu_kernel,
        out_shape=jax.ShapeDtypeStruct((M_pad, C_pad), jnp.float32),
        grid_spec=pltpu.PrefetchScalarGridSpec(
            num_scalar_prefetch=0,
            grid=(grid_m, grid_k),
            in_specs=[pl.BlockSpec((tile_m, tile_k), lambda i, k: (i, k)),
                      pl.BlockSpec((tile_k, C_pad), lambda i, k: (k, 0)),
                      pl.BlockSpec((1, C_pad), lambda i, k: (0, 0)),
                      pl.BlockSpec((1, C_pad), lambda i, k: (0, 0))],
            out_specs=pl.BlockSpec((tile_m, C_pad), lambda i, k: (i, 0))),
        compiler_params=pltpu.CompilerParams(
            dimension_semantics=("parallel", "arbitrary"),
            vmem_limit_bytes=VMEM_LIMIT),
        cost_estimate=pl.CostEstimate(
            flops=flops, transcendentals=0,
            bytes_accessed=p_bytes + w_bytes + M_pad * C_pad * 4),
    )(patches_p, w_p, scale, shift)

    # Lane-dense (M, C_out) rows -> NHWC -> NCHW to match the PyTorch module output.
    out = out2d[:M, :C_out].reshape(N, Ho, Wo, C_out).transpose(0, 3, 1, 2)
    return out


def reference_forward(x, w, b, gamma, beta, *, stride=1, padding=1):
    """Pure-JAX reference (same bf16 matmul operands, f32 accumulation)."""
    y = jax.lax.conv_general_dilated(
        x.astype(jnp.bfloat16), w.astype(jnp.bfloat16),
        window_strides=(stride, stride),
        padding=[(padding, padding), (padding, padding)],
        dimension_numbers=("NCHW", "OIHW", "NCHW"),
        preferred_element_type=jnp.float32)
    y = y + b.reshape(1, -1, 1, 1).astype(jnp.float32)   # cancelled by BN mean-subtract
    mean = jnp.mean(y, axis=(0, 2, 3), keepdims=True)
    var = jnp.mean((y - mean) ** 2, axis=(0, 2, 3), keepdims=True)
    y_hat = (y - mean) * jax.lax.rsqrt(var + EPS)
    out = y_hat * gamma.reshape(1, -1, 1, 1) + beta.reshape(1, -1, 1, 1)
    return jnp.maximum(out, 0.0)


if __name__ == "__main__":
    # Small shapes: batch=2, C_in=4, H=W=16, C_out=8, kernel_size=3, padding=1
    key = jax.random.PRNGKey(0)
    kx, kw_, kb = jax.random.split(key, 3)

    N, C_in, H, W = 2, 4, 16, 16
    C_out, kh, kw = 8, 3, 3

    x = jax.random.normal(kx, (N, C_in, H, W), dtype=jnp.float32)

    # Deterministic parameter init (Conv2d weight/bias, BN gamma=1, beta=0).
    fan_in = C_in * kh * kw
    bound = 1.0 / jnp.sqrt(jnp.float32(fan_in))
    w = jax.random.uniform(kw_, (C_out, C_in, kh, kw), jnp.float32, -bound, bound)
    b = jax.random.uniform(kb, (C_out,), jnp.float32, -bound, bound)
    gamma = jnp.ones((C_out,), jnp.float32)
    beta = jnp.zeros((C_out,), jnp.float32)

    # tile_m=256 so the toy problem (M = 2*16*16 = 512) exercises a 2-tile M grid
    # and the partial-stats reduction path (default tile_m is 2048 for real layers).
    out = conv_block_forward(x, w, b, gamma, beta, stride=1, padding=1, tile_m=256)
    out = jax.block_until_ready(out)

    assert out.shape == (N, C_out, H, W), out.shape
    assert bool(jnp.all(out >= 0.0))  # ReLU post-condition

    ref = reference_forward(x, w, b, gamma, beta, stride=1, padding=1)
    max_err = float(jnp.max(jnp.abs(out - ref)))
    assert bool(jnp.allclose(out, ref, atol=3e-2, rtol=0.0)), max_err

    print("KERNEL_OK")
</pallas_src>

<mosaic_0001>
module attributes {stable_mosaic.version = 11 : i64} {
  func.func @conv_stats_kernel(%arg0: i32, %arg1: i32, %arg2: memref<256x128xbf16, #tpu.memory_space<vmem>>, %arg3: memref<128x128xbf16, #tpu.memory_space<vmem>>, %arg4: memref<8x128xf32, #tpu.memory_space<vmem>>, %arg5: memref<256x128xf32, #tpu.memory_space<vmem>>) attributes {dimension_semantics = [#tpu.dimension_semantics<parallel>, #tpu.dimension_semantics<arbitrary>], iteration_bounds = array<i64: 2, 1>, scalar_prefetch = 0 : i64, scratch_operands = 1 : i64, tpu.core_type = #tpu.core_type<tc>, window_params = [{transform_indices = @transform_0, window_bounds = array<i64: 256, 128>}, {transform_indices = @transform_1, window_bounds = array<i64: 128, 128>}, {transform_indices = @transform_2, window_bounds = array<i64: 8, 128>}]} {
    %c0_i32 = arith.constant 0 : i32
    %0 = arith.cmpi eq, %arg1, %c0_i32 : i32
    %1 = arith.extui %0 : i1 to i32
    %c0_i32_0 = arith.constant 0 : i32
    %2 = arith.cmpi ne, %1, %c0_i32_0 : i32
    scf.if %2 {
      %cst_10 = arith.constant 0.000000e+00 : f32
      %12 = vector.broadcast %cst_10 : f32 to vector<256x128xf32>
      %c0_11 = arith.constant 0 : index
      %c0_12 = arith.constant 0 : index
      %13 = vector.load %arg5[%c0_11, %c0_12] : memref<256x128xf32, #tpu.memory_space<vmem>>, vector<256x128xf32>
      tpu.vector_store %arg5[%c0_11, %c0_12], %12 {strides = array<i32>} : memref<256x128xf32, #tpu.memory_space<vmem>>, vector<256x128xf32>,
    } else {
    }
    %c0 = arith.constant 0 : index
    %c0_1 = arith.constant 0 : index
    %3 = vector.load %arg5[%c0, %c0_1] : memref<256x128xf32, #tpu.memory_space<vmem>>, vector<256x128xf32>
    %c0_2 = arith.constant 0 : index
    %c0_3 = arith.constant 0 : index
    %4 = vector.load %arg2[%c0_2, %c0_3] : memref<256x128xbf16, #tpu.memory_space<vmem>>, vector<256x128xbf16>
    %c0_4 = arith.constant 0 : index
    %c0_5 = arith.constant 0 : index
    %5 = vector.load %arg3[%c0_4, %c0_5] : memref<128x128xbf16, #tpu.memory_space<vmem>>, vector<128x128xbf16>
    %cst = arith.constant dense<0.000000e+00> : vector<256x128xf32>
    %6 = tpu.matmul %4, %5, %cst {dimension_numbers = #tpu.dot_dimension_numbers<[1], [0], [0], [1], [0, 0, 1, 1], [], []>} : vector<256x128xbf16>, vector<128x128xbf16>, vector<256x128xf32> -> vector<256x128xf32>
    %7 = arith.addf %3, %6 : vector<256x128xf32>
    %c0_6 = arith.constant 0 : index
    %c0_7 = arith.constant 0 : index
    %8 = vector.load %arg5[%c0_6, %c0_7] : memref<256x128xf32, #tpu.memory_space<vmem>>, vector<256x128xf32>
    tpu.vector_store %arg5[%c0_6, %c0_7], %7 {strides = array<i32>} : memref<256x128xf32, #tpu.memory_space<vmem>>, vector<256x128xf32>,
    %c0_i32_8 = arith.constant 0 : i32
    %9 = arith.cmpi eq, %arg1, %c0_i32_8 : i32
    %10 = arith.extui %9 : i1 to i32
    %c0_i32_9 = arith.constant 0 : i32
    %11 = arith.cmpi ne, %10, %c0_i32_9 : i32
    scf.if %11 {
      %c0_10 = arith.constant 0 : index
      %c0_11 = arith.constant 0 : index
      %12 = vector.load %arg5[%c0_10, %c0_11] : memref<256x128xf32, #tpu.memory_space<vmem>>, vector<256x128xf32>
      %cst_12 = arith.constant 0.000000e+00 : f32
      %13 = vector.broadcast %cst_12 : f32 to vector<8x128xf32>
      %c0_13 = arith.constant 0 : index
      %c0_14 = arith.constant 0 : index
      %14 = vector.load %arg4[%c0_13, %c0_14] : memref<8x128xf32, #tpu.memory_space<vmem>>, vector<8x128xf32>
      tpu.vector_store %arg4[%c0_13, %c0_14], %13 {strides = array<i32>} : memref<8x128xf32, #tpu.memory_space<vmem>>, vector<8x128xf32>,
      %cst_15 = arith.constant dense<0.000000e+00> : vector<128xf32>
      %15 = vector.multi_reduction <add>, %12, %cst_15 [0] : vector<256x128xf32> to vector<128xf32>
      %16 = vector.shape_cast %15 : vector<128xf32> to vector<1x128xf32>
      %c0_16 = arith.constant 0 : index
      %c0_17 = arith.constant 0 : index
      %17 = vector.load %arg4[%c0_16, %c0_17] : memref<8x128xf32, #tpu.memory_space<vmem>>, vector<1x128xf32>
      tpu.vector_store %arg4[%c0_16, %c0_17], %16 {strides = array<i32>} : memref<8x128xf32, #tpu.memory_space<vmem>>, vector<1x128xf32>,
      %18 = arith.mulf %12, %12 : vector<256x128xf32>
      %cst_18 = arith.constant dense<0.000000e+00> : vector<128xf32>
      %19 = vector.multi_reduction <add>, %18, %cst_18 [0] : vector<256x128xf32> to vector<128xf32>
      %20 = vector.shape_cast %19 : vector<128xf32> to vector<1x128xf32>
      %c1 = arith.constant 1 : index
      %c0_19 = arith.constant 0 : index
      %21 = vector.load %arg4[%c1, %c0_19] : memref<8x128xf32, #tpu.memory_space<vmem>>, vector<1x128xf32>
      tpu.vector_store %arg4[%c1, %c0_19], %20 {strides = array<i32>} : memref<8x128xf32, #tpu.memory_space<vmem>>, vector<1x128xf32>,
    } else {
    }
    return
  }
  func.func @transform_0(%arg0: i32, %arg1: i32) -> (i32, i32) {
    %c0_i32 = arith.constant 0 : i32
    return %arg0, %arg1 : i32, i32
  }
  func.func @transform_1(%arg0: i32, %arg1: i32) -> (i32, i32) {
    %c0_i32 = arith.constant 0 : i32
    %c0_i32_0 = arith.constant 0 : i32
    return %arg1, %c0_i32 : i32, i32
  }
  func.func @transform_2(%arg0: i32, %arg1: i32) -> (i32, i32) {
    %c0_i32 = arith.constant 0 : i32
    %c0_i32_0 = arith.constant 0 : i32
    return %arg0, %c0_i32 : i32, i32
  }
}

</mosaic_0001>

<llo_original>
// kernel: tpu_custom_call.1
$region0: #{tpu_custom_call.1}
  #allocation0 [shape = 'u32[]', space=smem, size = 0x4, offset = 0x4, fixed_abs, tag = 'smem constant byte address 0x4 - core index']
  #allocation1 [shape = 'u32[72,128]{1,0:T(1,128)}', space=vmem, size = 0x9000, scoped, tag = 'internal scratch']
  #allocation2 [shape = 'f32[256,128]{1,0:T(8,128)}', space=vmem, size = 0x20000, scoped, tag = 'scratch operand']
  %s0 = inlined_call_operand.hbm [shape: bf16[512,128], index: 0, kind: input, shape index: {}]
  %s1 = inlined_call_operand.hbm [shape: bf16[128,128], index: 1, kind: input, shape index: {}]
  %s2 = inlined_call_operand.hbm [shape: f32[16,128], index: 2, kind: output, shape index: {}]
  %s3 = sld [smem:[#allocation0]]
  $region57: #{tpu_custom_call.1} parent=0
    _
  %s5 = ssub.s32 1, %s3
  %s6 = scalar_select 0, %s5, %s3
  $region1: #{tpu_custom_call.1} parent=0
    #allocation3 [shape = 'u8[131072]{0}', space=vmem, size = 0x20000, scoped, tag = 'input window, operand 0']
    #allocation4 [shape = 's32[2]{0}', space=sflag, size = 0x8, scoped, tag = 'scoped memory for tpu_custom_call.1']
    #allocation5 [shape = 's32[2]{0}', space=sflag, size = 0x8, scoped, tag = 'scoped memory for tpu_custom_call.1']
    #allocation6 [shape = 'u8[32768]{0}', space=vmem, size = 0x8000, scoped, tag = 'input window, operand 1, single buffered']
    #allocation7 [shape = 's32[1]{0}', space=sflag, size = 0x4, scoped, tag = 'scoped memory for tpu_custom_call.1']
    #allocation8 [shape = 'u8[8192]{0}', space=vmem, size = 0x2000, scoped, tag = 'output window, operand 0']
    %7 = vsyncpa [#allocation4], 0
    %s8 = scalar_lea.sflag [#allocation4], 1
    %9 = vsyncpa %s8, 0
    %10 = vsyncpa [#allocation7], 0
    %11 = vsyncpa [#allocation5], 0
    %s12 = scalar_lea.sflag [#allocation5], 1
    %13 = vsyncpa %s12, 0
    loop: start=0, step=1, limit=4
    $region2: #{tpu_custom_call.1} parent=1 // loop_pre_header
      _
    $region3: #{tpu_custom_call.1} parent=1 // loop_header
      %s15 = sphi 0, %s19
      %p16 = scmp.ge.s32.totalorder %s15, 4
      %s22 = sphi 0, %s34
      %s23 = sphi 0, %s30
      %s24 = sphi 0, %s22
      %s25 = sphi 0, %s23
      %s26 = sphi 0, %s24
      %s27 = sphi 0, %s25
      %s39 = sphi 0, %s41
      %s42 = sphi 0, %s39
      %s43 = sphi 0, %s42
      %s59 = sphi 0, %s43
      %s65 = sphi 0, %s67
      %s68 = sphi 0, %s65
      %s69 = sphi 0, %s68
      %s85 = sphi 0, %s69
      %s91 = sphi 0, %s93
      %s94 = sphi 0, %s91
      %s95 = sphi 0, %s94
      %s111 = sphi 0, %s95
    $region4: #{tpu_custom_call.1} parent=1 // loop_header_branch
      %18 = sbr.rel (%p16) target = $region8
    $region5: #{tpu_custom_call.1} parent=1 // loop_body
      %s20 = ssub.s32 %s15, 1
      %s21 = ssub.s32 %s15, 2
      %s28 = sadd.s32 1, %s23
      %p29 = scmp.ge.s32.totalorder %s28, 1
      %s30 = scalar_select %p29, 0, %s28
      %s31 = sadd.s32 1, %s22
      %s32 = scalar_select %p29, %s31, %s22
      %p33 = scmp.ge.s32.totalorder %s32, 2
      %s34 = scalar_select %p33, 0, %s32
      %s35 = ssub.s32 %s22, %s34
      %s36 = ssub.s32 %s23, %s30
      %s37 = sor.u32 %s35, %s36
      %p38 = scmp.eq.s32.totalorder %s37, 0
      %s40 = sadd.s32 %s39, 1
      %s41 = scalar_select %p38, %s39, %s40
      %p44 = pneg %p38
      %p45 = scmp.eq.s32.totalorder %s15, 1
      %p46 = por %p44, %p45
      %p47 = scmp.ne.s32.totalorder %s39, %s42
      %p48 = scmp.eq.s32.totalorder %s15, 0
      %p49 = por %p47, %p48
      %p50 = scmp.ne.s32.totalorder %s39, %s42
      %p51 = scmp.eq.s32.totalorder %s20, 1
      %p52 = por %p50, %p51
      %p53 = scmp.ne.s32.totalorder %s42, %s43
      %p54 = scmp.eq.s32.totalorder %s20, 0
      %p55 = por %p53, %p54
      %p56 = scmp.ne.s32.totalorder %s42, %s43
      %p57 = scmp.eq.s32.totalorder %s21, 1
      %p58 = por %p56, %p57
      %p60 = scmp.ne.s32.totalorder %s43, %s59
      %p61 = scmp.eq.s32.totalorder %s21, 0
      %p62 = por %p60, %p61
      %s63 = ssub.s32 %s23, %s30
      %p64 = scmp.eq.s32.totalorder %s63, 0
      %s66 = sadd.s32 %s65, 1
      %s67 = scalar_select %p64, %s65, %s66
      %p70 = pneg %p64
      %p71 = scmp.eq.s32.totalorder %s15, 1
      %p72 = por %p70, %p71
      %p73 = scmp.ne.s32.totalorder %s65, %s68
      %p74 = scmp.eq.s32.totalorder %s15, 0
      %p75 = por %p73, %p74
      %p76 = scmp.ne.s32.totalorder %s65, %s68
      %p77 = scmp.eq.s32.totalorder %s20, 1
      %p78 = por %p76, %p77
      %p79 = scmp.ne.s32.totalorder %s68, %s69
      %p80 = scmp.eq.s32.totalorder %s20, 0
      %p81 = por %p79, %p80
      %p82 = scmp.ne.s32.totalorder %s68, %s69
      %p83 = scmp.eq.s32.totalorder %s21, 1
      %p84 = por %p82, %p83
      %p86 = scmp.ne.s32.totalorder %s69, %s85
      %p87 = scmp.eq.s32.totalorder %s21, 0
      %p88 = por %p86, %p87
      %s89 = ssub.s32 %s22, %s34
      %p90 = scmp.eq.s32.totalorder %s89, 0
      %s92 = sadd.s32 %s91, 1
      %s93 = scalar_select %p90, %s91, %s92
      %p96 = pneg %p90
      %p97 = scmp.eq.s32.totalorder %s15, 1
      %p98 = por %p96, %p97
      %p99 = scmp.ne.s32.totalorder %s91, %s94
      %p100 = scmp.eq.s32.totalorder %s15, 0
      %p101 = por %p99, %p100
      %p102 = scmp.ne.s32.totalorder %s91, %s94
      %p103 = scmp.eq.s32.totalorder %s20, 1
      %p104 = por %p102, %p103
      %p105 = scmp.ne.s32.totalorder %s94, %s95
      %p106 = scmp.eq.s32.totalorder %s20, 0
      %p107 = por %p105, %p106
      %p108 = scmp.ne.s32.totalorder %s94, %s95
      %p109 = scmp.eq.s32.totalorder %s21, 1
      %p110 = por %p108, %p109
      %p112 = scmp.ne.s32.totalorder %s95, %s111
      %p113 = scmp.eq.s32.totalorder %s21, 0
      %p114 = por %p112, %p113
      %p115 = scmp.le.s32.totalorder 1, %s15
      %p116 = scmp.lt.s32.totalorder %s15, 3
      %p117 = pnand %p115, %p116
      %p118 = pneg %p117
      // Predicated region
      $region9: #{tpu_custom_call.1} parent=5 // pred_check
        _
      $region10: #{tpu_custom_call.1} parent=5 // pred_check_branch
        %120 = sbr.rel (%p117) target = $region12
      $region11: #{tpu_custom_call.1} parent=5 // pred_region
        %s121 = ssub.s32 %s15, 1
        // Predicated region
        $region13: #{tpu_custom_call.1} parent=11 // pred_check
          %p122 = pneg %p81
        $region14: #{tpu_custom_call.1} parent=11 // pred_check_branch
          %124 = sbr.rel (%p122) target = $region16
        $region15: #{tpu_custom_call.1} parent=11 // pred_region
          %s125 = smul.u32 16, %s25
          %127 = vsyncadd [#allocation7], 0
          %s128 = smul.addr %s125, 4
          %s129 = scalar_lea.hbm %s1, %s128
          %s130 = sshll.u32 %s129, 4
          %s131 = int_to_ptr.hbm [resolvable:$true] %s130
          %s132 = sshll.u32 [#allocation6], 4
          %s133 = int_to_ptr.vmem [resolvable:$true] %s132
          %138 = dma.hbm_to_vmem [thread:$0]  %s131, 1024, %s133, [#allocation7], 64, 64, 4
        $region16: #{tpu_custom_call.1} parent=11 // pred_fallthru
          _
      $region12: #{tpu_custom_call.1} parent=5 // pred_fallthru
        _
      %p139 = scmp.lt.s32.totalorder %s15, 2
      // Predicated region
      $region17: #{tpu_custom_call.1} parent=5 // pred_check
        %p140 = pneg %p139
      $region18: #{tpu_custom_call.1} parent=5 // pred_check_branch
        %142 = sbr.rel (%p140) target = $region20
      $region19: #{tpu_custom_call.1} parent=5 // pred_region
        // Predicated region
        $region21: #{tpu_custom_call.1} parent=19 // pred_check
          %p143 = pneg %p49
        $region22: #{tpu_custom_call.1} parent=19 // pred_check_branch
          %145 = sbr.rel (%p143) target = $region24
        $region23: #{tpu_custom_call.1} parent=19 // pred_region
          %s146 = sand.u32 %s39, 1
          %s147 = scalar_lea.sflag [#allocation4], %s146
          %s148 = sand.u32 %s39, 1
          %s149 = smul.addr %s148, 128
          %s150 = scalar_lea.vmem [#allocation3], %s149
          %s151 = smul.u32 32, %s22
          %153 = vsyncadd %s147, 0
          %s154 = sadd.s32 %s23, %s151
          %s155 = smul.addr %s154, 4
          %s156 = scalar_lea.hbm %s0, %s155
          %s157 = sshll.u32 %s156, 4
          %s158 = int_to_ptr.hbm [resolvable:$true] %s157
          %s159 = sshll.u32 %s150, 4
          %s160 = int_to_ptr.vmem [resolvable:$true] %s159
          %165 = dma.hbm_to_vmem [thread:$0]  %s158, 2048, %s160, %s147, 64, 64, 4
        $region24: #{tpu_custom_call.1} parent=19 // pred_fallthru
          _
      $region20: #{tpu_custom_call.1} parent=5 // pred_fallthru
        _
      %p166 = scmp.le.s32.totalorder 1, %s15
      %p167 = scmp.lt.s32.totalorder %s15, 3
      %p168 = pnand %p166, %p167
      %p169 = pneg %p168
      // Predicated region
      $region25: #{tpu_custom_call.1} parent=5 // pred_check
        _
      $region26: #{tpu_custom_call.1} parent=5 // pred_check_branch
        %171 = sbr.rel (%p168) target = $region28
      $region27: #{tpu_custom_call.1} parent=5 // pred_region
        %s172 = ssub.s32 %s15, 1
        %s173 = sand.u32 %s42, 1
        %s174 = scalar_lea.sflag [#allocation4], %s173
        %s175 = sand.u32 %s42, 1
        %s176 = smul.addr %s175, 128
        %s177 = scalar_lea.vmem [#allocation3], %s176
        // Predicated region
        $region29: #{tpu_custom_call.1} parent=27 // pred_check
          %p178 = pneg %p55
        $region30: #{tpu_custom_call.1} parent=27 // pred_check_branch
          %180 = sbr.rel (%p178) target = $region32
        $region31: #{tpu_custom_call.1} parent=27 // pred_region
          %182 = dma.done %s174, 2048
        $region32: #{tpu_custom_call.1} parent=27 // pred_fallthru
          _
        // Predicated region
        $region33: #{tpu_custom_call.1} parent=27 // pred_check
          %p183 = pneg %p81
        $region34: #{tpu_custom_call.1} parent=27 // pred_check_branch
          %185 = sbr.rel (%p183) target = $region36
        $region35: #{tpu_custom_call.1} parent=27 // pred_region
          %187 = dma.done [#allocation7], 1024
        $region36: #{tpu_custom_call.1} parent=27 // pred_fallthru
          _
        %s188 = sand.u32 %s42, 1
        %s189 = scalar_lea.sflag [#allocation4], %s188
        %s190 = sand.u32 %s42, 1
        %s191 = smul.addr %s190, 128
        %s192 = scalar_lea.vmem [#allocation3], %s191
        %p193 = pneg %p55
        %p194 = pneg %p52
        %p195 = pneg %p81
        %p196 = pneg %p78
        %p197 = pneg %p107
        %p198 = pneg %p104
        %s199 = sand.u32 %s94, 1
        %s200 = scalar_lea.sflag [#allocation5], %s199
        %s201 = sand.u32 %s94, 1
        %s202 = smul.addr %s201, 8
        %s203 = scalar_lea.vmem [#allocation8], %s202
        %s204 = smul.u32 32, %s24
        %s205 = smul.u32 16, %s25
        %p206 = scmp.eq.s32.totalorder %s25, 0
        // Predicated region
        $region37: #{tpu_custom_call.1} parent=27 // pred_check
          %p207 = pneg %p206
        $region38: #{tpu_custom_call.1} parent=27 // pred_check_branch
          %209 = sbr.rel (%p207) target = $region40
        $region39: #{tpu_custom_call.1} parent=27 // pred_region
          %210 = vst [vmem:[#allocation2] sm:$0xff] 0.0
          %211 = vst [vmem:[#allocation2 + $0x8] sm:$0xff] 0.0
          %212 = vst [vmem:[#allocation2 + $0x10] sm:$0xff] 0.0
          %213 = vst [vmem:[#allocation2 + $0x18] sm:$0xff] 0.0
          %214 = vst [vmem:[#allocation2 + $0x20] sm:$0xff] 0.0
          %215 = vst [vmem:[#allocation2 + $0x28] sm:$0xff] 0.0
          %216 = vst [vmem:[#allocation2 + $0x30] sm:$0xff] 0.0
          %217 = vst [vmem:[#allocation2 + $0x38] sm:$0xff] 0.0
          %218 = vst [vmem:[#allocation2 + $0x40] sm:$0xff] 0.0
          %219 = vst [vmem:[#allocation2 + $0x48] sm:$0xff] 0.0
          %220 = vst [vmem:[#allocation2 + $0x50] sm:$0xff] 0.0
          %221 = vst [vmem:[#allocation2 + $0x58] sm:$0xff] 0.0
          %222 = vst [vmem:[#allocation2 + $0x60] sm:$0xff] 0.0
          %223 = vst [vmem:[#allocation2 + $0x68] sm:$0xff] 0.0
          %224 = vst [vmem:[#allocation2 + $0x70] sm:$0xff] 0.0
          %225 = vst [vmem:[#allocation2 + $0x78] sm:$0xff] 0.0
          %226 = vst [vmem:[#allocation2 + $0x80] sm:$0xff] 0.0
          %227 = vst [vmem:[#allocation2 + $0x88] sm:$0xff] 0.0
          %228 = vst [vmem:[#allocation2 + $0x90] sm:$0xff] 0.0
          %229 = vst [vmem:[#allocation2 + $0x98] sm:$0xff] 0.0
          %230 = vst [vmem:[#allocation2 + $0xa0] sm:$0xff] 0.0
          %231 = vst [vmem:[#allocation2 + $0xa8] sm:$0xff] 0.0
          %232 = vst [vmem:[#allocation2 + $0xb0] sm:$0xff] 0.0
          %233 = vst [vmem:[#allocation2 + $0xb8] sm:$0xff] 0.0
          %234 = vst [vmem:[#allocation2 + $0xc0] sm:$0xff] 0.0
          %235 = vst [vmem:[#allocation2 + $0xc8] sm:$0xff] 0.0
          %236 = vst [vmem:[#allocation2 + $0xd0] sm:$0xff] 0.0
          %237 = vst [vmem:[#allocation2 + $0xd8] sm:$0xff] 0.0
          %238 = vst [vmem:[#allocation2 + $0xe0] sm:$0xff] 0.0
          %239 = vst [vmem:[#allocation2 + $0xe8] sm:$0xff] 0.0
          %240 = vst [vmem:[#allocation2 + $0xf0] sm:$0xff] 0.0
          %241 = vst [vmem:[#allocation2 + $0xf8] sm:$0xff] 0.0
        $region40: #{tpu_custom_call.1} parent=27 // pred_fallthru
          _
        %v242 = vld [vmem:[#allocation2] sm:$0xff]
        %v243 = vld [vmem:[#allocation2 + $0x8] sm:$0xff]
        %v244 = vld [vmem:[#allocation2 + $0x10] sm:$0xff]
        %v245 = vld [vmem:[#allocation2 + $0x18] sm:$0xff]
        %v246 = vld [vmem:[#allocation2 + $0x20] sm:$0xff]
        %v247 = vld [vmem:[#allocation2 + $0x28] sm:$0xff]
        %v248 = vld [vmem:[#allocation2 + $0x30] sm:$0xff]
        %v249 = vld [vmem:[#allocation2 + $0x38] sm:$0xff]
        %v250 = vld [vmem:[#allocation2 + $0x40] sm:$0xff]
        %v251 = vld [vmem:[#allocation2 + $0x48] sm:$0xff]
        %v252 = vld [vmem:[#allocation2 + $0x50] sm:$0xff]
        %v253 = vld [vmem:[#allocation2 + $0x58] sm:$0xff]
        %v254 = vld [vmem:[#allocation2 + $0x60] sm:$0xff]
        %v255 = vld [vmem:[#allocation2 + $0x68] sm:$0xff]
        %v256 = vld [vmem:[#allocation2 + $0x70] sm:$0xff]
        %v257 = vld [vmem:[#allocation2 + $0x78] sm:$0xff]
        %v258 = vld [vmem:[#allocation2 + $0x80] sm:$0xff]
        %v259 = vld [vmem:[#allocation2 + $0x88] sm:$0xff]
        %v260 = vld [vmem:[#allocation2 + $0x90] sm:$0xff]
        %v261 = vld [vmem:[#allocation2 + $0x98] sm:$0xff]
        %v262 = vld [vmem:[#allocation2 + $0xa0] sm:$0xff]
        %v263 = vld [vmem:[#allocation2 + $0xa8] sm:$0xff]
        %v264 = vld [vmem:[#allocation2 + $0xb0] sm:$0xff]
        %v265 = vld [vmem:[#allocation2 + $0xb8] sm:$0xff]
        %v266 = vld [vmem:[#allocation2 + $0xc0] sm:$0xff]
        %v267 = vld [vmem:[#allocation2 + $0xc8] sm:$0xff]
        %v268 = vld [vmem:[#allocation2 + $0xd0] sm:$0xff]
        %v269 = vld [vmem:[#allocation2 + $0xd8] sm:$0xff]
        %v270 = vld [vmem:[#allocation2 + $0xe0] sm:$0xff]
        %v271 = vld [vmem:[#allocation2 + $0xe8] sm:$0xff]
        %v272 = vld [vmem:[#allocation2 + $0xf0] sm:$0xff]
        %v273 = vld [vmem:[#allocation2 + $0xf8] sm:$0xff]
        %v274 = vld [vmem:[%s177] sm:$0xf]
        %v275 = vld [vmem:[%s177 + $0x4] sm:$0xf]
        %v276 = vld [vmem:[%s177 + $0x8] sm:$0xf]
        %v277 = vld [vmem:[%s177 + $0xc] sm:$0xf]
        %v278 = vld [vmem:[%s177 + $0x10] sm:$0xf]
        %v279 = vld [vmem:[%s177 + $0x14] sm:$0xf]
        %v280 = vld [vmem:[%s177 + $0x18] sm:$0xf]
        %v281 = vld [vmem:[%s177 + $0x1c] sm:$0xf]
        %v282 = vld [vmem:[%s177 + $0x20] sm:$0xf]
        %v283 = vld [vmem:[%s177 + $0x24] sm:$0xf]
        %v284 = vld [vmem:[%s177 + $0x28] sm:$0xf]
        %v285 = vld [vmem:[%s177 + $0x2c] sm:$0xf]
        %v286 = vld [vmem:[%s177 + $0x30] sm:$0xf]
        %v287 = vld [vmem:[%s177 + $0x34] sm:$0xf]
        %v288 = vld [vmem:[%s177 + $0x38] sm:$0xf]
        %v289 = vld [vmem:[%s177 + $0x3c] sm:$0xf]
        %v290 = vld [vmem:[%s177 + $0x40] sm:$0xf]
        %v291 = vld [vmem:[%s177 + $0x44] sm:$0xf]
        %v292 = vld [vmem:[%s177 + $0x48] sm:$0xf]
        %v293 = vld [vmem:[%s177 + $0x4c] sm:$0xf]
        %v294 = vld [vmem:[%s177 + $0x50] sm:$0xf]
        %v295 = vld [vmem:[%s177 + $0x54] sm:$0xf]
        %v296 = vld [vmem:[%s177 + $0x58] sm:$0xf]
        %v297 = vld [vmem:[%s177 + $0x5c] sm:$0xf]
        %v298 = vld [vmem:[%s177 + $0x60] sm:$0xf]
        %v299 = vld [vmem:[%s177 + $0x64] sm:$0xf]
        %v300 = vld [vmem:[%s177 + $0x68] sm:$0xf]
        %v301 = vld [vmem:[%s177 + $0x6c] sm:$0xf]
        %v302 = vld [vmem:[%s177 + $0x70] sm:$0xf]
        %v303 = vld [vmem:[%s177 + $0x74] sm:$0xf]
        %v304 = vld [vmem:[%s177 + $0x78] sm:$0xf]
        %v305 = vld [vmem:[%s177 + $0x7c] sm:$0xf]
        %v306 = vld [vmem:[#allocation6] sm:$0xf]
        %v307 = vld [vmem:[#allocation6 + $0x4] sm:$0xf]
        %v308 = vld [vmem:[#allocation6 + $0x8] sm:$0xf]
        %v309 = vld [vmem:[#allocation6 + $0xc] sm:$0xf]
        %v310 = vld [vmem:[#allocation6 + $0x10] sm:$0xf]
        %v311 = vld [vmem:[#allocation6 + $0x14] sm:$0xf]
        %v312 = vld [vmem:[#allocation6 + $0x18] sm:$0xf]
        %v313 = vld [vmem:[#allocation6 + $0x1c] sm:$0xf]
        %v314 = vld [vmem:[#allocation6 + $0x20] sm:$0xf]
        %v315 = vld [vmem:[#allocation6 + $0x24] sm:$0xf]
        %v316 = vld [vmem:[#allocation6 + $0x28] sm:$0xf]
        %v317 = vld [vmem:[#allocation6 + $0x2c] sm:$0xf]
        %v318 = vld [vmem:[#allocation6 + $0x30] sm:$0xf]
        %v319 = vld [vmem:[#allocation6 + $0x34] sm:$0xf]
        %v320 = vld [vmem:[#allocation6 + $0x38] sm:$0xf]
        %v321 = vld [vmem:[#allocation6 + $0x3c] sm:$0xf]
        %v354 = vunpack.c.l.b16 %v274
        %v355 = vunpack.c.l.b16 %v275
        %v356 = vunpack.c.l.b16 %v276
        %v357 = vunpack.c.l.b16 %v277
        %v358 = vunpack.c.l.b16 %v278
        %v359 = vunpack.c.l.b16 %v279
        %v360 = vunpack.c.l.b16 %v280
        %v361 = vunpack.c.l.b16 %v281
        %v362 = vunpack.c.l.b16 %v282
        %v363 = vunpack.c.l.b16 %v283
        %v364 = vunpack.c.l.b16 %v284
        %v365 = vunpack.c.l.b16 %v285
        %v366 = vunpack.c.l.b16 %v286
        %v367 = vunpack.c.l.b16 %v287
        %v368 = vunpack.c.l.b16 %v288
        %v369 = vunpack.c.l.b16 %v289
        %v370 = vunpack.c.l.b16 %v290
        %v371 = vunpack.c.l.b16 %v291
        %v372 = vunpack.c.l.b16 %v292
        %v373 = vunpack.c.l.b16 %v293
        %v374 = vunpack.c.l.b16 %v294
        %v375 = vunpack.c.l.b16 %v295
        %v376 = vunpack.c.l.b16 %v296
        %v377 = vunpack.c.l.b16 %v297
        %v378 = vunpack.c.l.b16 %v298
        %v379 = vunpack.c.l.b16 %v299
        %v380 = vunpack.c.l.b16 %v300
        %v381 = vunpack.c.l.b16 %v301
        %v382 = vunpack.c.l.b16 %v302
        %v383 = vunpack.c.l.b16 %v303
        %v384 = vunpack.c.l.b16 %v304
        %v385 = vunpack.c.l.b16 %v305
        %v386 = vpack.c.b16 %v355, %v354
        %v387 = vpack.c.b16 %v357, %v356
        %v388 = vpack.c.b16 %v359, %v358
        %v389 = vpack.c.b16 %v361, %v360
        %v390 = vpack.c.b16 %v363, %v362
        %v391 = vpack.c.b16 %v365, %v364
        %v392 = vpack.c.b16 %v367, %v366
        %v393 = vpack.c.b16 %v369, %v368
        %v394 = vpack.c.b16 %v371, %v370
        %v395 = vpack.c.b16 %v373, %v372
        %v396 = vpack.c.b16 %v375, %v374
        %v397 = vpack.c.b16 %v377, %v376
        %v398 = vpack.c.b16 %v379, %v378
        %v399 = vpack.c.b16 %v381, %v380
        %v400 = vpack.c.b16 %v383, %v382
        %v401 = vpack.c.b16 %v385, %v384
        %v434 = vunpack.c.l.b16 %v306
        %v435 = vunpack.c.l.b16 %v307
        %v436 = vunpack.c.l.b16 %v308
        %v437 = vunpack.c.l.b16 %v309
        %v438 = vunpack.c.l.b16 %v310
        %v439 = vunpack.c.l.b16 %v311
        %v440 = vunpack.c.l.b16 %v312
        %v441 = vunpack.c.l.b16 %v313
        %v442 = vunpack.c.l.b16 %v314
        %v443 = vunpack.c.l.b16 %v315
        %v444 = vunpack.c.l.b16 %v316
        %v445 = vunpack.c.l.b16 %v317
        %v446 = vunpack.c.l.b16 %v318
        %v447 = vunpack.c.l.b16 %v319
        %v448 = vunpack.c.l.b16 %v320
        %v449 = vunpack.c.l.b16 %v321
        %v450 = vpack.c.b16 %v435, %v434
        %v451 = vpack.c.b16 %v437, %v436
        %v452 = vpack.c.b16 %v439, %v438
        %v453 = vpack.c.b16 %v441, %v440
        %v454 = vpack.c.b16 %v443, %v442
        %v455 = vpack.c.b16 %v445, %v444
        %v456 = vpack.c.b16 %v447, %v446
        %v457 = vpack.c.b16 %v449, %v448
        %466 = vmatpush.bf16.msra.mxu0 %v457
        %467 = vmatpush.bf16.msra.mxu0 %v456
        %468 = vmatpush.bf16.msra.mxu0 %v455
        %469 = vmatpush.bf16.msra.mxu0 %v454
        %470 = vmatpush.bf16.msra.mxu0 %v453
        %471 = vmatpush.bf16.msra.mxu0 %v452
        %472 = vmatpush.bf16.msra.mxu0 %v451
        %473 = vmatpush.bf16.msra.mxu0 %v450
        %474 = vmatmul.bf16.gmra.mxu0 %v386
        %v475 = vpop.f32.mrf.mxu0
        %v476 = vadd.f32 0.0, %v475
        %v477 = vpop.f32.mrf.mxu0
        %v478 = vadd.f32 0.0, %v477
        %479 = vmatmul.bf16.gmra.mxu0 %v387
        %v480 = vpop.f32.mrf.mxu0
        %v481 = vadd.f32 0.0, %v480
        %v482 = vpop.f32.mrf.mxu0
        %v483 = vadd.f32 0.0, %v482
        %484 = vmatmul.bf16.gmra.mxu0 %v388
        %v485 = vpop.f32.mrf.mxu0
        %v486 = vadd.f32 0.0, %v485
        %v487 = vpop.f32.mrf.mxu0
        %v488 = vadd.f32 0.0, %v487
        %489 = vmatmul.bf16.gmra.mxu0 %v389
        %v490 = vpop.f32.mrf.mxu0
        %v491 = vadd.f32 0.0, %v490
        %v492 = vpop.f32.mrf.mxu0
        %v493 = vadd.f32 0.0, %v492
        %494 = vmatmul.bf16.gmra.mxu0 %v390
        %v495 = vpop.f32.mrf.mxu0
        %v496 = vadd.f32 0.0, %v495
        %v497 = vpop.f32.mrf.mxu0
        %v498 = vadd.f32 0.0, %v497
        %499 = vmatmul.bf16.gmra.mxu0 %v391
        %v500 = vpop.f32.mrf.mxu0
        %v501 = vadd.f32 0.0, %v500
        %v502 = vpop.f32.mrf.mxu0
        %v503 = vadd.f32 0.0, %v502
        %504 = vmatmul.bf16.gmra.mxu0 %v392
        %v505 = vpop.f32.mrf.mxu0
        %v506 = vadd.f32 0.0, %v505
        %v507 = vpop.f32.mrf.mxu0
        %v508 = vadd.f32 0.0, %v507
        %509 = vmatmul.bf16.gmra.mxu0 %v393
        %v510 = vpop.f32.mrf.mxu0
        %v511 = vadd.f32 0.0, %v510
        %v512 = vpop.f32.mrf.mxu0
        %v513 = vadd.f32 0.0, %v512
        %514 = vmatmul.bf16.gmra.mxu0 %v394
        %v515 = vpop.f32.mrf.mxu0
        %v516 = vadd.f32 0.0, %v515
        %v517 = vpop.f32.mrf.mxu0
        %v518 = vadd.f32 0.0, %v517
        %519 = vmatmul.bf16.gmra.mxu0 %v395
        %v520 = vpop.f32.mrf.mxu0
        %v521 = vadd.f32 0.0, %v520
        %v522 = vpop.f32.mrf.mxu0
        %v523 = vadd.f32 0.0, %v522
        %524 = vmatmul.bf16.gmra.mxu0 %v396
        %v525 = vpop.f32.mrf.mxu0
        %v526 = vadd.f32 0.0, %v525
        %v527 = vpop.f32.mrf.mxu0
        %v528 = vadd.f32 0.0, %v527
        %529 = vmatmul.bf16.gmra.mxu0 %v397
        %v530 = vpop.f32.mrf.mxu0
        %v531 = vadd.f32 0.0, %v530
        %v532 = vpop.f32.mrf.mxu0
        %v533 = vadd.f32 0.0, %v532
        %534 = vmatmul.bf16.gmra.mxu0 %v398
        %v535 = vpop.f32.mrf.mxu0
        %v536 = vadd.f32 0.0, %v535
        %v537 = vpop.f32.mrf.mxu0
        %v538 = vadd.f32 0.0, %v537
        %539 = vmatmul.bf16.gmra.mxu0 %v399
        %v540 = vpop.f32.mrf.mxu0
        %v541 = vadd.f32 0.0, %v540
        %v542 = vpop.f32.mrf.mxu0
        %v543 = vadd.f32 0.0, %v542
        %544 = vmatmul.bf16.gmra.mxu0 %v400
        %v545 = vpop.f32.mrf.mxu0
        %v546 = vadd.f32 0.0, %v545
        %v547 = vpop.f32.mrf.mxu0
        %v548 = vadd.f32 0.0, %v547
        %549 = vmatmul.bf16.gmra.mxu0 %v401
        %v550 = vpop.f32.mrf.mxu0
        %v551 = vadd.f32 0.0, %v550
        %v552 = vpop.f32.mrf.mxu0
        %v553 = vadd.f32 0.0, %v552
        %554 = vdwg.mxu0
        %v555 = vadd.f32 %v242, %v476
        %v556 = vadd.f32 %v243, %v478
        %v557 = vadd.f32 %v244, %v481
        %v558 = vadd.f32 %v245, %v483
        %v559 = vadd.f32 %v246, %v486
        %v560 = vadd.f32 %v247, %v488
        %v561 = vadd.f32 %v248, %v491
        %v562 = vadd.f32 %v249, %v493
        %v563 = vadd.f32 %v250, %v496
        %v564 = vadd.f32 %v251, %v498
        %v565 = vadd.f32 %v252, %v501
        %v566 = vadd.f32 %v253, %v503
        %v567 = vadd.f32 %v254, %v506
        %v568 = vadd.f32 %v255, %v508
        %v569 = vadd.f32 %v256, %v511
        %v570 = vadd.f32 %v257, %v513
        %v571 = vadd.f32 %v258, %v516
        %v572 = vadd.f32 %v259, %v518
        %v573 = vadd.f32 %v260, %v521
        %v574 = vadd.f32 %v261, %v523
        %v575 = vadd.f32 %v262, %v526
        %v576 = vadd.f32 %v263, %v528
        %v577 = vadd.f32 %v264, %v531
        %v578 = vadd.f32 %v265, %v533
        %v579 = vadd.f32 %v266, %v536
        %v580 = vadd.f32 %v267, %v538
        %v581 = vadd.f32 %v268, %v541
        %v582 = vadd.f32 %v269, %v543
        %v583 = vadd.f32 %v270, %v546
        %v584 = vadd.f32 %v271, %v548
        %v585 = vadd.f32 %v272, %v551
        %v586 = vadd.f32 %v273, %v553
        %587 = vst [vmem:[#allocation2] sm:$0xff] %v555
        %588 = vst [vmem:[#allocation2 + $0x8] sm:$0xff] %v556
        %589 = vst [vmem:[#allocation2 + $0x10] sm:$0xff] %v557
        %590 = vst [vmem:[#allocation2 + $0x18] sm:$0xff] %v558
        %591 = vst [vmem:[#allocation2 + $0x20] sm:$0xff] %v559
        %592 = vst [vmem:[#allocation2 + $0x28] sm:$0xff] %v560
        %593 = vst [vmem:[#allocation2 + $0x30] sm:$0xff] %v561
        %594 = vst [vmem:[#allocation2 + $0x38] sm:$0xff] %v562
        %595 = vst [vmem:[#allocation2 + $0x40] sm:$0xff] %v563
        %596 = vst [vmem:[#allocation2 + $0x48] sm:$0xff] %v564
        %597 = vst [vmem:[#allocation2 + $0x50] sm:$0xff] %v565
        %598 = vst [vmem:[#allocation2 + $0x58] sm:$0xff] %v566
        %599 = vst [vmem:[#allocation2 + $0x60] sm:$0xff] %v567
        %600 = vst [vmem:[#allocation2 + $0x68] sm:$0xff] %v568
        %601 = vst [vmem:[#allocation2 + $0x70] sm:$0xff] %v569
        %602 = vst [vmem:[#allocation2 + $0x78] sm:$0xff] %v570
        %603 = vst [vmem:[#allocation2 + $0x80] sm:$0xff] %v571
        %604 = vst [vmem:[#allocation2 + $0x88] sm:$0xff] %v572
        %605 = vst [vmem:[#allocation2 + $0x90] sm:$0xff] %v573
        %606 = vst [vmem:[#allocation2 + $0x98] sm:$0xff] %v574
        %607 = vst [vmem:[#allocation2 + $0xa0] sm:$0xff] %v575
        %608 = vst [vmem:[#allocation2 + $0xa8] sm:$0xff] %v576
        %609 = vst [vmem:[#allocation2 + $0xb0] sm:$0xff] %v577
        %610 = vst [vmem:[#allocation2 + $0xb8] sm:$0xff] %v578
        %611 = vst [vmem:[#allocation2 + $0xc0] sm:$0xff] %v579
        %612 = vst [vmem:[#allocation2 + $0xc8] sm:$0xff] %v580
        %613 = vst [vmem:[#allocation2 + $0xd0] sm:$0xff] %v581
        %614 = vst [vmem:[#allocation2 + $0xd8] sm:$0xff] %v582
        %615 = vst [vmem:[#allocation2 + $0xe0] sm:$0xff] %v583
        %616 = vst [vmem:[#allocation2 + $0xe8] sm:$0xff] %v584
        %617 = vst [vmem:[#allocation2 + $0xf0] sm:$0xff] %v585
        %618 = vst [vmem:[#allocation2 + $0xf8] sm:$0xff] %v586
        // Predicated region
        $region41: #{tpu_custom_call.1} parent=27 // pred_check
          %p619 = pneg %p206
        $region42: #{tpu_custom_call.1} parent=27 // pred_check_branch
          %621 = sbr.rel (%p619) target = $region44
        $region43: #{tpu_custom_call.1} parent=27 // pred_region
          %v622 = vld [vmem:[#allocation2] sm:$0xff]
          %v623 = vld [vmem:[#allocation2 + $0x8] sm:$0xff]
          %v624 = vld [vmem:[#allocation2 + $0x10] sm:$0xff]
          %v625 = vld [vmem:[#allocation2 + $0x18] sm:$0xff]
          %v626 = vld [vmem:[#allocation2 + $0x20] sm:$0xff]
          %v627 = vld [vmem:[#allocation2 + $0x28] sm:$0xff]
          %v628 = vld [vmem:[#allocation2 + $0x30] sm:$0xff]
          %v629 = vld [vmem:[#allocation2 + $0x38] sm:$0xff]
          %v630 = vld [vmem:[#allocation2 + $0x40] sm:$0xff]
          %v631 = vld [vmem:[#allocation2 + $0x48] sm:$0xff]
          %v632 = vld [vmem:[#allocation2 + $0x50] sm:$0xff]
          %v633 = vld [vmem:[#allocation2 + $0x58] sm:$0xff]
          %v634 = vld [vmem:[#allocation2 + $0x60] sm:$0xff]
          %v635 = vld [vmem:[#allocation2 + $0x68] sm:$0xff]
          %v636 = vld [vmem:[#allocation2 + $0x70] sm:$0xff]
          %v637 = vld [vmem:[#allocation2 + $0x78] sm:$0xff]
          %v638 = vld [vmem:[#allocation2 + $0x80] sm:$0xff]
          %v639 = vld [vmem:[#allocation2 + $0x88] sm:$0xff]
          %v640 = vld [vmem:[#allocation2 + $0x90] sm:$0xff]
          %v641 = vld [vmem:[#allocation2 + $0x98] sm:$0xff]
          %v642 = vld [vmem:[#allocation2 + $0xa0] sm:$0xff]
          %v643 = vld [vmem:[#allocation2 + $0xa8] sm:$0xff]
          %v644 = vld [vmem:[#allocation2 + $0xb0] sm:$0xff]
          %v645 = vld [vmem:[#allocation2 + $0xb8] sm:$0xff]
          %v646 = vld [vmem:[#allocation2 + $0xc0] sm:$0xff]
          %v647 = vld [vmem:[#allocation2 + $0xc8] sm:$0xff]
          %v648 = vld [vmem:[#allocation2 + $0xd0] sm:$0xff]
          %v649 = vld [vmem:[#allocation2 + $0xd8] sm:$0xff]
          %v650 = vld [vmem:[#allocation2 + $0xe0] sm:$0xff]
          %v651 = vld [vmem:[#allocation2 + $0xe8] sm:$0xff]
          %v652 = vld [vmem:[#allocation2 + $0xf0] sm:$0xff]
          %v653 = vld [vmem:[#allocation2 + $0xf8] sm:$0xff]
          %654 = vst [vmem:[%s203] sm:$0xff] 0.0
          %v655 = vadd.f32 %v622, %v623
          %v656 = vadd.f32 %v655, %v624
          %v657 = vadd.f32 %v656, %v625
          %v658 = vadd.f32 %v657, %v626
          %v659 = vadd.f32 %v658, %v627
          %v660 = vadd.f32 %v659, %v628
          %v661 = vadd.f32 %v660, %v629
          %v662 = vadd.f32 %v661, %v630
          %v663 = vadd.f32 %v662, %v631
          %v664 = vadd.f32 %v663, %v632
          %v665 = vadd.f32 %v664, %v633
          %v666 = vadd.f32 %v665, %v634
          %v667 = vadd.f32 %v666, %v635
          %v668 = vadd.f32 %v667, %v636
          %v669 = vadd.f32 %v668, %v637
          %v670 = vadd.f32 %v669, %v638
          %v671 = vadd.f32 %v670, %v639
          %v672 = vadd.f32 %v671, %v640
          %v673 = vadd.f32 %v672, %v641
          %v674 = vadd.f32 %v673, %v642
          %v675 = vadd.f32 %v674, %v643
          %v676 = vadd.f32 %v675, %v644
          %v677 = vadd.f32 %v676, %v645
          %v678 = vadd.f32 %v677, %v646
          %v679 = vadd.f32 %v678, %v647
          %v680 = vadd.f32 %v679, %v648
          %v681 = vadd.f32 %v680, %v649
          %v682 = vadd.f32 %v681, %v650
          %v683 = vadd.f32 %v682, %v651
          %v684 = vadd.f32 %v683, %v652
          %v685 = vadd.f32 %v684, %v653
          %v686 = vrot.slane %v685, 4
          %v687 = vadd.f32 %v685, %v686
          %v688 = vrot.slane %v687, 2
          %v689 = vadd.f32 %v687, %v688
          %v690 = vrot.slane %v689, 1
          %v691 = vadd.f32 %v689, %v690
          %692 = vst [vmem:[%s203] sm:$0x1] %v691
          %v693 = vmul.f32 %v622, %v622
          %v694 = vmul.f32 %v623, %v623
          %v695 = vmul.f32 %v624, %v624
          %v696 = vmul.f32 %v625, %v625
          %v697 = vmul.f32 %v626, %v626
          %v698 = vmul.f32 %v627, %v627
          %v699 = vmul.f32 %v628, %v628
          %v700 = vmul.f32 %v629, %v629
          %v701 = vmul.f32 %v630, %v630
          %v702 = vmul.f32 %v631, %v631
          %v703 = vmul.f32 %v632, %v632
          %v704 = vmul.f32 %v633, %v633
          %v705 = vmul.f32 %v634, %v634
          %v706 = vmul.f32 %v635, %v635
          %v707 = vmul.f32 %v636, %v636
          %v708 = vmul.f32 %v637, %v637
          %v709 = vmul.f32 %v638, %v638
          %v710 = vmul.f32 %v639, %v639
          %v711 = vmul.f32 %v640, %v640
          %v712 = vmul.f32 %v641, %v641
          %v713 = vmul.f32 %v642, %v642
          %v714 = vmul.f32 %v643, %v643
          %v715 = vmul.f32 %v644, %v644
          %v716 = vmul.f32 %v645, %v645
          %v717 = vmul.f32 %v646, %v646
          %v718 = vmul.f32 %v647, %v647
          %v719 = vmul.f32 %v648, %v648
          %v720 = vmul.f32 %v649, %v649
          %v721 = vmul.f32 %v650, %v650
          %v722 = vmul.f32 %v651, %v651
          %v723 = vmul.f32 %v652, %v652
          %v724 = vmul.f32 %v653, %v653
          %v725 = vadd.f32 %v693, %v694
          %v726 = vadd.f32 %v725, %v695
          %v727 = vadd.f32 %v726, %v696
          %v728 = vadd.f32 %v727, %v697
          %v729 = vadd.f32 %v728, %v698
          %v730 = vadd.f32 %v729, %v699
          %v731 = vadd.f32 %v730, %v700
          %v732 = vadd.f32 %v731, %v701
          %v733 = vadd.f32 %v732, %v702
          %v734 = vadd.f32 %v733, %v703
          %v735 = vadd.f32 %v734, %v704
          %v736 = vadd.f32 %v735, %v705
          %v737 = vadd.f32 %v736, %v706
          %v738 = vadd.f32 %v737, %v707
          %v739 = vadd.f32 %v738, %v708
          %v740 = vadd.f32 %v739, %v709
          %v741 = vadd.f32 %v740, %v710
          %v742 = vadd.f32 %v741, %v711
          %v743 = vadd.f32 %v742, %v712
          %v744 = vadd.f32 %v743, %v713
          %v745 = vadd.f32 %v744, %v714
          %v746 = vadd.f32 %v745, %v715
          %v747 = vadd.f32 %v746, %v716
          %v748 = vadd.f32 %v747, %v717
          %v749 = vadd.f32 %v748, %v718
          %v750 = vadd.f32 %v749, %v719
          %v751 = vadd.f32 %v750, %v720
          %v752 = vadd.f32 %v751, %v721
          %v753 = vadd.f32 %v752, %v722
          %v754 = vadd.f32 %v753, %v723
          %v755 = vadd.f32 %v754, %v724
          %v756 = vrot.slane %v755, 4
          %v757 = vadd.f32 %v755, %v756
          %v758 = vrot.slane %v757, 2
          %v759 = vadd.f32 %v757, %v758
          %v760 = vrot.slane %v759, 1
          %v761 = vadd.f32 %v759, %v760
          %762 = vst [vmem:[%s203 + $0x1] sm:$0x1] %v761
        $region44: #{tpu_custom_call.1} parent=27 // pred_fallthru
          _
        %s763 = sand.u32 %s94, 1
        %s764 = scalar_lea.sflag [#allocation5], %s763
        %s765 = sand.u32 %s94, 1
        %s766 = smul.addr %s765, 8
        %s767 = scalar_lea.vmem [#allocation8], %s766
        // Predicated region
        $region45: #{tpu_custom_call.1} parent=27 // pred_check
          %p768 = pneg %p104
        $region46: #{tpu_custom_call.1} parent=27 // pred_check_branch
          %770 = sbr.rel (%p768) target = $region48
        $region47: #{tpu_custom_call.1} parent=27 // pred_region
          %772 = vsyncadd %s764, 0
          %s773 = smul.addr %s24, 8
          %s774 = scalar_lea.hbm %s2, %s773
          %s776 = sshll.u32 %s767, 4
          %s777 = int_to_ptr.vmem [resolvable:$true] %s776
          %s778 = sshll.u32 %s774, 4
          %s779 = int_to_ptr.hbm [resolvable:$true] %s778
          %781 = dma.vmem_to_hbm [thread:$0]  %s777, 128, %s779, %s764
        $region48: #{tpu_custom_call.1} parent=27 // pred_fallthru
          _
      $region28: #{tpu_custom_call.1} parent=5 // pred_fallthru
        _
      %p782 = scmp.le.s32.totalorder 2, %s15
      // Predicated region
      $region49: #{tpu_custom_call.1} parent=5 // pred_check
        %p783 = pneg %p782
      $region50: #{tpu_custom_call.1} parent=5 // pred_check_branch
        %785 = sbr.rel (%p783) target = $region52
      $region51: #{tpu_custom_call.1} parent=5 // pred_region
        %s786 = ssub.s32 %s15, 2
        // Predicated region
        $region53: #{tpu_custom_call.1} parent=51 // pred_check
          %p787 = pneg %p110
        $region54: #{tpu_custom_call.1} parent=51 // pred_check_branch
          %789 = sbr.rel (%p787) target = $region56
        $region55: #{tpu_custom_call.1} parent=51 // pred_region
          %s790 = sand.u32 %s95, 1
          %s791 = scalar_lea.sflag [#allocation5], %s790
          %s792 = sand.u32 %s95, 1
          %s793 = smul.addr %s792, 8
          %s794 = scalar_lea.vmem [#allocation8], %s793
          %796 = dma.done %s791, 128
        $region56: #{tpu_custom_call.1} parent=51 // pred_fallthru
          _
      $region52: #{tpu_custom_call.1} parent=5 // pred_fallthru
        _
    $region6: #{tpu_custom_call.1} parent=1 // loop_footer
      %s19 = sadd.s32 1, %s15
    $region7: #{tpu_custom_call.1} parent=1 // loop_footer_branch
      %14 = sbr.rel target = $region3
    $region8: #{tpu_custom_call.1} parent=1 // loop_exit
      _
    %797 = vsyncpa [#allocation4], 1
    %s798 = scalar_lea.sflag [#allocation4], 1
    %799 = vsyncpa %s798, 1
    %800 = vsyncpa [#allocation7], 1
    %801 = vsyncpa [#allocation5], 1
    %s802 = scalar_lea.sflag [#allocation5], 1
    %803 = vsyncpa %s802, 1

</llo_original>
